<compile_context>
chip_gen: v5e
topology: v5e:2x2
jax: 0.10.0
libtpu: 0.0.40
codegen_flags: <defaults>
</compile_context>

<pallas_src>
import jax
import jax.numpy as jnp
from jax import lax
from jax.experimental import pallas as pl
from jax.experimental.pallas import tpu as pltpu

HIDDEN_SIZE = 32
OUTPUT_SIZE = 64
LANE = 128          # TPU lane width; 4*H == LANE so the fused gate dot is exactly lane-dense
assert 4 * HIDDEN_SIZE == LANE


def _decoder_kernel(tok_ref,                 # (T,) int32  SMEM (scalar prefetch)
                    emb_ref,                 # (O, H)      embedding table (VMEM-resident)
                    h0_ref,                  # (1, H)      initial hidden
                    w_gru_ref,               # (2H, LANE)  fused [x;h] gate weights [r|z|n_i|n_h]
                    b_gru_ref,               # (1, LANE)   fused gate biases
                    w_out_ref,               # (H, LANE)   output projection (lane-padded)
                    b_out_ref,               # (1, LANE)
                    logits_ref,              # (T, LANE)   raw logits (padded)        [out]
                    hfin_ref,                # (1, H)      final hidden               [out]
                    hstack_sc):              # (T, H)      per-step hidden stack      [scratch]
    H = HIDDEN_SIZE
    T = hstack_sc.shape[0]

    w_gru = w_gru_ref[...]                   # stays resident across the whole decode
    b_gru = b_gru_ref[...]

    def step(t, h):
        # F.relu(embedding(token)) -- in-kernel row gather from the resident table
        x = jnp.maximum(emb_ref[pl.ds(tok_ref[t], 1), :], 0.0)        # (1, H)
        xh = jnp.concatenate([x, h], axis=1)                          # (1, 2H)

        # One fused (1,2H)x(2H,128) MXU dot covers all gates for x and h.
        g = jnp.dot(xh, w_gru, preferred_element_type=jnp.float32) + b_gru

        # PyTorch GRU cell, gate order [r, z, n]; lane groups [r | z | n_i | n_h]:
        #   r = sigmoid(W_ir x + W_hr h + b_ir + b_hr)
        #   z = sigmoid(W_iz x + W_hz h + b_iz + b_hz)
        #   n = tanh  (W_in x + b_in + r * (W_hn h + b_hn))
        #   h' = (1 - z) * n + z * h
        r = jax.nn.sigmoid(g[:, 0:H])
        z = jax.nn.sigmoid(g[:, H:2 * H])
        n = jnp.tanh(g[:, 2 * H:3 * H] + r * g[:, 3 * H:4 * H])
        h_new = (1.0 - z) * n + z * h

        hstack_sc[pl.ds(t, 1), :] = h_new    # stash for the batched output projection
        return h_new

    # Recurrence entirely in-kernel; h carried in vregs across the unrolled loop.
    h_final = lax.fori_loop(0, T, step, h0_ref[...], unroll=True)
    hfin_ref[...] = h_final

    # One batched (T,H)x(H,128) projection + a single dense (T,128) store.
    logits_ref[...] = (
        jnp.dot(hstack_sc[...], w_out_ref[...], preferred_element_type=jnp.float32)
        + b_out_ref[...])


@jax.jit
def decoder_decode(token_ids, h0, packed):
    """Run T teacher-forced decoder steps in ONE pallas_call (single grid step).

    token_ids: (T,) int32 ; h0: (1, H) f32.
    Returns (log_probs (T, O) f32, h_final (1, H) f32).
    """
    T = token_ids.shape[0]
    H, O = HIDDEN_SIZE, OUTPUT_SIZE
    const = lambda shape: pl.BlockSpec(shape, lambda i, tok: (0,) * len(shape))

    logits_pad, h_fin = pl.pallas_call(
        _decoder_kernel,
        out_shape=(
            jax.ShapeDtypeStruct((T, LANE), jnp.float32),
            jax.ShapeDtypeStruct((1, H), jnp.float32),
        ),
        grid_spec=pltpu.PrefetchScalarGridSpec(
            num_scalar_prefetch=1,              # token ids -> SMEM, read inside the kernel
            grid=(1,),                          # whole decode in a single grid step
            in_specs=[
                const((O, H)),                  # embedding table  -- VMEM-resident
                const((1, H)),                  # h0
                const((2 * H, LANE)),           # fused GRU weights
                const((1, LANE)),               # fused GRU biases
                const((H, LANE)),               # W_out (lane-padded)
                const((1, LANE)),               # b_out (lane-padded)
            ],
            out_specs=[
                const((T, LANE)),               # all-step logits, written once
                const((1, H)),                  # final hidden
            ],
            scratch_shapes=[pltpu.VMEM((T, H), jnp.float32)],   # hidden-state stack
        ),
        compiler_params=pltpu.CompilerParams(
            dimension_semantics=("arbitrary",)),
    )(token_ids, packed["embedding"], h0, packed["w_gru"], packed["b_gru"],
      packed["w_out"], packed["b_out"])

    # log_softmax hoisted out of the sequential kernel (one batched op over T rows).
    return jax.nn.log_softmax(logits_pad[:, :O], axis=-1), h_fin


def decoder_rnn_forward(token_id, hidden, packed):
    """Exact DecoderRNN.forward semantics (one step):
        token_id: scalar int, hidden: (1, 1, H)
       returns (log_probs (1, O), hidden (1, 1, H))."""
    token_ids = jnp.asarray(token_id, jnp.int32).reshape(1)
    h0 = hidden.reshape(1, HIDDEN_SIZE).astype(jnp.float32)
    logp, h_new = decoder_decode(token_ids, h0, packed)
    return logp, h_new.reshape(1, 1, HIDDEN_SIZE)


# ----------------------------- parameters -----------------------------------

def init_params(key, hidden_size, output_size):
    """Deterministic synthetic parameters (shapes match nn.Embedding / nn.GRU / nn.Linear)."""
    H, O = hidden_size, output_size
    ks = jax.random.split(key, 8)
    bound = 1.0 / jnp.sqrt(jnp.float32(H))
    u = lambda k, shape: jax.random.uniform(k, shape, jnp.float32, -bound, bound)
    return {
        "embedding": jax.random.normal(ks[0], (O, H), jnp.float32),  # nn.Embedding(O, H)
        "w_ih": u(ks[1], (3, H, H)),     # gate-stacked [r, z, n], stored (in, out)
        "w_hh": u(ks[2], (3, H, H)),
        "b_ih": u(ks[3], (3, 1, H)),
        "b_hh": u(ks[4], (3, 1, H)),
        "w_out": u(ks[5], (H, O)),       # Linear(H, O), stored (in, out)
        "b_out": u(ks[6], (1, O)),
    }


def pack_params(params):
    """One-time repack into the kernel's fused lane-dense layout (outside the hot loop)."""
    H = HIDDEN_SIZE
    zeros = jnp.zeros((H, H), jnp.float32)
    # Fused [x ; h] weight (2H, 4H): rows 0:H take the x contributions, rows H:2H the
    # h contributions; lane groups are [r | z | n_i | n_h].
    w_gru = jnp.concatenate([
        jnp.concatenate([params["w_ih"][0], params["w_ih"][1], params["w_ih"][2], zeros], axis=1),
        jnp.concatenate([params["w_hh"][0], params["w_hh"][1], zeros, params["w_hh"][2]], axis=1),
    ], axis=0)
    # r/z biases pre-summed; b_in / b_hn in their own lane groups (b_hn is r-gated).
    b_gru = jnp.concatenate([
        params["b_ih"][0] + params["b_hh"][0],
        params["b_ih"][1] + params["b_hh"][1],
        params["b_ih"][2],
        params["b_hh"][2],
    ], axis=1)

    def pad_lanes(a):
        return jnp.pad(a, ((0, 0), (0, LANE - a.shape[1])))

    return {
        "embedding": params["embedding"].astype(jnp.float32),
        "w_gru": w_gru.astype(jnp.float32),          # (2H, 128)
        "b_gru": b_gru.astype(jnp.float32),          # (1, 128)
        "w_out": pad_lanes(params["w_out"]),         # (H, 128), pad cols zero
        "b_out": pad_lanes(params["b_out"]),         # (1, 128), pad cols zero (sliced off)
    }


# ----------------------------- pure-JAX reference ----------------------------

def _reference_step(token_id, h, params):
    H = HIDDEN_SIZE
    x = jnp.maximum(params["embedding"][token_id].reshape(1, H), 0.0)
    gi = [x @ params["w_ih"][g] + params["b_ih"][g] for g in range(3)]
    gh = [h @ params["w_hh"][g] + params["b_hh"][g] for g in range(3)]
    r = jax.nn.sigmoid(gi[0] + gh[0])
    z = jax.nn.sigmoid(gi[1] + gh[1])
    n = jnp.tanh(gi[2] + r * gh[2])
    h_new = (1.0 - z) * n + z * h
    logits = h_new @ params["w_out"] + params["b_out"]
    return jax.nn.log_softmax(logits, axis=1), h_new


def _reference_decode(token_ids, h0, params):
    h = h0
    logps = []
    for t in range(token_ids.shape[0]):
        logp, h = _reference_step(token_ids[t], h, params)
        logps.append(logp)
    return jnp.concatenate(logps, axis=0), h


# ----------------------------------- main ------------------------------------

if __name__ == "__main__":
    key = jax.random.PRNGKey(0)
    params = init_params(key, HIDDEN_SIZE, OUTPUT_SIZE)
    packed = pack_params(params)

    # --- multi-step decode: whole T-step loop inside ONE pallas_call ---------
    T = 8
    token_ids = jax.random.randint(jax.random.PRNGKey(1), (T,), 0, OUTPUT_SIZE, jnp.int32)
    h0 = jnp.zeros((1, HIDDEN_SIZE), jnp.float32)            # initHidden()

    logp_seq, h_final = decoder_decode(token_ids, h0, packed)
    jax.block_until_ready((logp_seq, h_final))

    ref_logp_seq, ref_h_final = _reference_decode(token_ids, h0, params)
    assert logp_seq.shape == (T, OUTPUT_SIZE)
    assert h_final.shape == (1, HIDDEN_SIZE)
    assert jnp.allclose(logp_seq, ref_logp_seq, atol=1e-4, rtol=1e-4), \
        float(jnp.max(jnp.abs(logp_seq - ref_logp_seq)))
    assert jnp.allclose(h_final, ref_h_final, atol=1e-4, rtol=1e-4)

    # --- single-step path: exact original DecoderRNN.forward semantics -------
    token_id = jnp.int32(5)
    hidden0 = jnp.zeros((1, 1, HIDDEN_SIZE), jnp.float32)
    logp1, hidden1 = decoder_rnn_forward(token_id, hidden0, packed)
    jax.block_until_ready((logp1, hidden1))

    ref_logp1, ref_h1 = _reference_step(token_id, hidden0.reshape(1, HIDDEN_SIZE), params)
    assert logp1.shape == (1, OUTPUT_SIZE)
    assert hidden1.shape == (1, 1, HIDDEN_SIZE)
    assert jnp.allclose(logp1, ref_logp1, atol=1e-4, rtol=1e-4)
    assert jnp.allclose(hidden1.reshape(1, HIDDEN_SIZE), ref_h1, atol=1e-4, rtol=1e-4)

    print("KERNEL_OK")
</pallas_src>

<mosaic_0001>
module attributes {stable_mosaic.version = 11 : i64} {
  func.func @_decoder_kernel(%arg0: i32, %arg1: memref<8xi32, #tpu.memory_space<smem>>, %arg2: memref<64x32xf32, #tpu.memory_space<vmem>>, %arg3: memref<1x32xf32, #tpu.memory_space<vmem>>, %arg4: memref<64x128xf32, #tpu.memory_space<vmem>>, %arg5: memref<1x128xf32, #tpu.memory_space<vmem>>, %arg6: memref<32x128xf32, #tpu.memory_space<vmem>>, %arg7: memref<1x128xf32, #tpu.memory_space<vmem>>, %arg8: memref<8x128xf32, #tpu.memory_space<vmem>>, %arg9: memref<1x32xf32, #tpu.memory_space<vmem>>, %arg10: memref<8x32xf32, #tpu.memory_space<vmem>>) attributes {dimension_semantics = [#tpu.dimension_semantics<arbitrary>], iteration_bounds = array<i64: 1>, scalar_prefetch = 1 : i64, scratch_operands = 1 : i64, tpu.core_type = #tpu.core_type<tc>, window_params = [{pipeline_mode = #tpu.pipeline_mode<synchronous>, transform_indices = @transform_0, window_bounds = array<i64: 64, 32>}, {pipeline_mode = #tpu.pipeline_mode<synchronous>, transform_indices = @transform_1, window_bounds = array<i64: 1, 32>}, {pipeline_mode = #tpu.pipeline_mode<synchronous>, transform_indices = @transform_2, window_bounds = array<i64: 64, 128>}, {pipeline_mode = #tpu.pipeline_mode<synchronous>, transform_indices = @transform_3, window_bounds = array<i64: 1, 128>}, {pipeline_mode = #tpu.pipeline_mode<synchronous>, transform_indices = @transform_4, window_bounds = array<i64: 32, 128>}, {pipeline_mode = #tpu.pipeline_mode<synchronous>, transform_indices = @transform_5, window_bounds = array<i64: 1, 128>}, {pipeline_mode = #tpu.pipeline_mode<synchronous>, transform_indices = @transform_6, window_bounds = array<i64: 8, 128>}, {pipeline_mode = #tpu.pipeline_mode<synchronous>, transform_indices = @transform_7, window_bounds = array<i64: 1, 32>}]} {
    %c0 = arith.constant 0 : index
    %c0_0 = arith.constant 0 : index
    %0 = vector.load %arg4[%c0, %c0_0] : memref<64x128xf32, #tpu.memory_space<vmem>>, vector<64x128xf32>
    %c0_1 = arith.constant 0 : index
    %c0_2 = arith.constant 0 : index
    %1 = vector.load %arg5[%c0_1, %c0_2] : memref<1x128xf32, #tpu.memory_space<vmem>>, vector<1x128xf32>
    %c0_3 = arith.constant 0 : index
    %c0_4 = arith.constant 0 : index
    %2 = vector.load %arg3[%c0_3, %c0_4] : memref<1x32xf32, #tpu.memory_space<vmem>>, vector<1x32xf32>
    %c0_i32 = arith.constant 0 : i32
    %3 = arith.index_cast %c0_i32 : i32 to index
    %4 = memref.load %arg1[%3] : memref<8xi32, #tpu.memory_space<smem>>
    %5 = arith.index_cast %4 : i32 to index
    %c0_5 = arith.constant 0 : index
    %6 = vector.load %arg2[%5, %c0_5] : memref<64x32xf32, #tpu.memory_space<vmem>>, vector<1x32xf32>
    %cst = arith.constant 0.000000e+00 : f32
    %7 = vector.broadcast %cst : f32 to vector<1x32xf32>
    %8 = arith.maximumf %6, %7 : vector<1x32xf32>
    %9 = tpu.concatenate %8, %2 in 1 : vector<1x32xf32>, vector<1x32xf32> -> vector<1x64xf32>
    %cst_6 = arith.constant dense<0.000000e+00> : vector<1x128xf32>
    %10 = tpu.matmul %9, %0, %cst_6 {dimension_numbers = #tpu.dot_dimension_numbers<[1], [0], [0], [1], [0, 0, 1, 1], [], []>} : vector<1x64xf32>, vector<64x128xf32>, vector<1x128xf32> -> vector<1x128xf32>
    %11 = arith.addf %10, %1 : vector<1x128xf32>
    %12 = vector.extract_strided_slice %11 {offsets = [0, 0], sizes = [1, 32], strides = [1, 1]} : vector<1x128xf32> to vector<1x32xf32>
    %13 = arith.negf %12 : vector<1x32xf32>
    %14 = math.exp %13 : vector<1x32xf32>
    %cst_7 = arith.constant 1.000000e+00 : f32
    %15 = vector.broadcast %cst_7 : f32 to vector<1x32xf32>
    %16 = arith.addf %15, %14 : vector<1x32xf32>
    %17 = arith.divf %15, %16 : vector<1x32xf32>
    %18 = vector.extract_strided_slice %11 {offsets = [0, 32], sizes = [1, 32], strides = [1, 1]} : vector<1x128xf32> to vector<1x32xf32>
    %19 = arith.negf %18 : vector<1x32xf32>
    %20 = math.exp %19 : vector<1x32xf32>
    %cst_8 = arith.constant 1.000000e+00 : f32
    %21 = vector.broadcast %cst_8 : f32 to vector<1x32xf32>
    %22 = arith.addf %21, %20 : vector<1x32xf32>
    %23 = arith.divf %21, %22 : vector<1x32xf32>
    %24 = vector.extract_strided_slice %11 {offsets = [0, 64], sizes = [1, 32], strides = [1, 1]} : vector<1x128xf32> to vector<1x32xf32>
    %25 = vector.extract_strided_slice %11 {offsets = [0, 96], sizes = [1, 32], strides = [1, 1]} : vector<1x128xf32> to vector<1x32xf32>
    %26 = arith.mulf %17, %25 : vector<1x32xf32>
    %27 = arith.addf %24, %26 : vector<1x32xf32>
    %28 = math.tanh %27 : vector<1x32xf32>
    %cst_9 = arith.constant 1.000000e+00 : f32
    %29 = vector.broadcast %cst_9 : f32 to vector<1x32xf32>
    %30 = arith.subf %29, %23 : vector<1x32xf32>
    %31 = arith.mulf %30, %28 : vector<1x32xf32>
    %32 = arith.mulf %23, %2 : vector<1x32xf32>
    %33 = arith.addf %31, %32 : vector<1x32xf32>
    %34 = arith.index_cast %c0_i32 : i32 to index
    %c0_10 = arith.constant 0 : index
    %35 = vector.load %arg10[%34, %c0_10] : memref<8x32xf32, #tpu.memory_space<vmem>>, vector<1x32xf32>
    tpu.vector_store %arg10[%34, %c0_10], %33 {strides = array<i32>} : memref<8x32xf32, #tpu.memory_space<vmem>>, vector<1x32xf32>,
    %c1_i32 = arith.constant 1 : i32
    %36 = arith.index_cast %c1_i32 : i32 to index
    %37 = memref.load %arg1[%36] : memref<8xi32, #tpu.memory_space<smem>>
    %38 = arith.index_cast %37 : i32 to index
    %c0_11 = arith.constant 0 : index
    %39 = vector.load %arg2[%38, %c0_11] : memref<64x32xf32, #tpu.memory_space<vmem>>, vector<1x32xf32>
    %cst_12 = arith.constant 0.000000e+00 : f32
    %40 = vector.broadcast %cst_12 : f32 to vector<1x32xf32>
    %41 = arith.maximumf %39, %40 : vector<1x32xf32>
    %42 = tpu.concatenate %41, %33 in 1 : vector<1x32xf32>, vector<1x32xf32> -> vector<1x64xf32>
    %cst_13 = arith.constant dense<0.000000e+00> : vector<1x128xf32>
    %43 = tpu.matmul %42, %0, %cst_13 {dimension_numbers = #tpu.dot_dimension_numbers<[1], [0], [0], [1], [0, 0, 1, 1], [], []>} : vector<1x64xf32>, vector<64x128xf32>, vector<1x128xf32> -> vector<1x128xf32>
    %44 = arith.addf %43, %1 : vector<1x128xf32>
    %45 = vector.extract_strided_slice %44 {offsets = [0, 0], sizes = [1, 32], strides = [1, 1]} : vector<1x128xf32> to vector<1x32xf32>
    %46 = arith.negf %45 : vector<1x32xf32>
    %47 = math.exp %46 : vector<1x32xf32>
    %cst_14 = arith.constant 1.000000e+00 : f32
    %48 = vector.broadcast %cst_14 : f32 to vector<1x32xf32>
    %49 = arith.addf %48, %47 : vector<1x32xf32>
    %50 = arith.divf %48, %49 : vector<1x32xf32>
    %51 = vector.extract_strided_slice %44 {offsets = [0, 32], sizes = [1, 32], strides = [1, 1]} : vector<1x128xf32> to vector<1x32xf32>
    %52 = arith.negf %51 : vector<1x32xf32>
    %53 = math.exp %52 : vector<1x32xf32>
    %cst_15 = arith.constant 1.000000e+00 : f32
    %54 = vector.broadcast %cst_15 : f32 to vector<1x32xf32>
    %55 = arith.addf %54, %53 : vector<1x32xf32>
    %56 = arith.divf %54, %55 : vector<1x32xf32>
    %57 = vector.extract_strided_slice %44 {offsets = [0, 64], sizes = [1, 32], strides = [1, 1]} : vector<1x128xf32> to vector<1x32xf32>
    %58 = vector.extract_strided_slice %44 {offsets = [0, 96], sizes = [1, 32], strides = [1, 1]} : vector<1x128xf32> to vector<1x32xf32>
    %59 = arith.mulf %50, %58 : vector<1x32xf32>
    %60 = arith.addf %57, %59 : vector<1x32xf32>
    %61 = math.tanh %60 : vector<1x32xf32>
    %cst_16 = arith.constant 1.000000e+00 : f32
    %62 = vector.broadcast %cst_16 : f32 to vector<1x32xf32>
    %63 = arith.subf %62, %56 : vector<1x32xf32>
    %64 = arith.mulf %63, %61 : vector<1x32xf32>
    %65 = arith.mulf %56, %33 : vector<1x32xf32>
    %66 = arith.addf %64, %65 : vector<1x32xf32>
    %67 = arith.index_cast %c1_i32 : i32 to index
    %c0_17 = arith.constant 0 : index
    %68 = vector.load %arg10[%67, %c0_17] : memref<8x32xf32, #tpu.memory_space<vmem>>, vector<1x32xf32>
    tpu.vector_store %arg10[%67, %c0_17], %66 {strides = array<i32>} : memref<8x32xf32, #tpu.memory_space<vmem>>, vector<1x32xf32>,
    %c2_i32 = arith.constant 2 : i32
    %69 = arith.index_cast %c2_i32 : i32 to index
    %70 = memref.load %arg1[%69] : memref<8xi32, #tpu.memory_space<smem>>
    %71 = arith.index_cast %70 : i32 to index
    %c0_18 = arith.constant 0 : index
    %72 = vector.load %arg2[%71, %c0_18] : memref<64x32xf32, #tpu.memory_space<vmem>>, vector<1x32xf32>
    %cst_19 = arith.constant 0.000000e+00 : f32
    %73 = vector.broadcast %cst_19 : f32 to vector<1x32xf32>
    %74 = arith.maximumf %72, %73 : vector<1x32xf32>
    %75 = tpu.concatenate %74, %66 in 1 : vector<1x32xf32>, vector<1x32xf32> -> vector<1x64xf32>
    %cst_20 = arith.constant dense<0.000000e+00> : vector<1x128xf32>
    %76 = tpu.matmul %75, %0, %cst_20 {dimension_numbers = #tpu.dot_dimension_numbers<[1], [0], [0], [1], [0, 0, 1, 1], [], []>} : vector<1x64xf32>, vector<64x128xf32>, vector<1x128xf32> -> vector<1x128xf32>
    %77 = arith.addf %76, %1 : vector<1x128xf32>
    %78 = vector.extract_strided_slice %77 {offsets = [0, 0], sizes = [1, 32], strides = [1, 1]} : vector<1x128xf32> to vector<1x32xf32>
    %79 = arith.negf %78 : vector<1x32xf32>
    %80 = math.exp %79 : vector<1x32xf32>
    %cst_21 = arith.constant 1.000000e+00 : f32
    %81 = vector.broadcast %cst_21 : f32 to vector<1x32xf32>
    %82 = arith.addf %81, %80 : vector<1x32xf32>
    %83 = arith.divf %81, %82 : vector<1x32xf32>
    %84 = vector.extract_strided_slice %77 {offsets = [0, 32], sizes = [1, 32], strides = [1, 1]} : vector<1x128xf32> to vector<1x32xf32>
    %85 = arith.negf %84 : vector<1x32xf32>
    %86 = math.exp %85 : vector<1x32xf32>
    %cst_22 = arith.constant 1.000000e+00 : f32
    %87 = vector.broadcast %cst_22 : f32 to vector<1x32xf32>
    %88 = arith.addf %87, %86 : vector<1x32xf32>
    %89 = arith.divf %87, %88 : vector<1x32xf32>
    %90 = vector.extract_strided_slice %77 {offsets = [0, 64], sizes = [1, 32], strides = [1, 1]} : vector<1x128xf32> to vector<1x32xf32>
    %91 = vector.extract_strided_slice %77 {offsets = [0, 96], sizes = [1, 32], strides = [1, 1]} : vector<1x128xf32> to vector<1x32xf32>
    %92 = arith.mulf %83, %91 : vector<1x32xf32>
    %93 = arith.addf %90, %92 : vector<1x32xf32>
    %94 = math.tanh %93 : vector<1x32xf32>
    %cst_23 = arith.constant 1.000000e+00 : f32
    %95 = vector.broadcast %cst_23 : f32 to vector<1x32xf32>
    %96 = arith.subf %95, %89 : vector<1x32xf32>
    %97 = arith.mulf %96, %94 : vector<1x32xf32>
    %98 = arith.mulf %89, %66 : vector<1x32xf32>
    %99 = arith.addf %97, %98 : vector<1x32xf32>
    %100 = arith.index_cast %c2_i32 : i32 to index
    %c0_24 = arith.constant 0 : index
    %101 = vector.load %arg10[%100, %c0_24] : memref<8x32xf32, #tpu.memory_space<vmem>>, vector<1x32xf32>
    tpu.vector_store %arg10[%100, %c0_24], %99 {strides = array<i32>} : memref<8x32xf32, #tpu.memory_space<vmem>>, vector<1x32xf32>,
    %c3_i32 = arith.constant 3 : i32
    %102 = arith.index_cast %c3_i32 : i32 to index
    %103 = memref.load %arg1[%102] : memref<8xi32, #tpu.memory_space<smem>>
    %104 = arith.index_cast %103 : i32 to index
    %c0_25 = arith.constant 0 : index
    %105 = vector.load %arg2[%104, %c0_25] : memref<64x32xf32, #tpu.memory_space<vmem>>, vector<1x32xf32>
    %cst_26 = arith.constant 0.000000e+00 : f32
    %106 = vector.broadcast %cst_26 : f32 to vector<1x32xf32>
    %107 = arith.maximumf %105, %106 : vector<1x32xf32>
    %108 = tpu.concatenate %107, %99 in 1 : vector<1x32xf32>, vector<1x32xf32> -> vector<1x64xf32>
    %cst_27 = arith.constant dense<0.000000e+00> : vector<1x128xf32>
    %109 = tpu.matmul %108, %0, %cst_27 {dimension_numbers = #tpu.dot_dimension_numbers<[1], [0], [0], [1], [0, 0, 1, 1], [], []>} : vector<1x64xf32>, vector<64x128xf32>, vector<1x128xf32> -> vector<1x128xf32>
    %110 = arith.addf %109, %1 : vector<1x128xf32>
    %111 = vector.extract_strided_slice %110 {offsets = [0, 0], sizes = [1, 32], strides = [1, 1]} : vector<1x128xf32> to vector<1x32xf32>
    %112 = arith.negf %111 : vector<1x32xf32>
    %113 = math.exp %112 : vector<1x32xf32>
    %cst_28 = arith.constant 1.000000e+00 : f32
    %114 = vector.broadcast %cst_28 : f32 to vector<1x32xf32>
    %115 = arith.addf %114, %113 : vector<1x32xf32>
    %116 = arith.divf %114, %115 : vector<1x32xf32>
    %117 = vector.extract_strided_slice %110 {offsets = [0, 32], sizes = [1, 32], strides = [1, 1]} : vector<1x128xf32> to vector<1x32xf32>
    %118 = arith.negf %117 : vector<1x32xf32>
    %119 = math.exp %118 : vector<1x32xf32>
    %cst_29 = arith.constant 1.000000e+00 : f32
    %120 = vector.broadcast %cst_29 : f32 to vector<1x32xf32>
    %121 = arith.addf %120, %119 : vector<1x32xf32>
    %122 = arith.divf %120, %121 : vector<1x32xf32>
    %123 = vector.extract_strided_slice %110 {offsets = [0, 64], sizes = [1, 32], strides = [1, 1]} : vector<1x128xf32> to vector<1x32xf32>
    %124 = vector.extract_strided_slice %110 {offsets = [0, 96], sizes = [1, 32], strides = [1, 1]} : vector<1x128xf32> to vector<1x32xf32>
    %125 = arith.mulf %116, %124 : vector<1x32xf32>
    %126 = arith.addf %123, %125 : vector<1x32xf32>
    %127 = math.tanh %126 : vector<1x32xf32>
    %cst_30 = arith.constant 1.000000e+00 : f32
    %128 = vector.broadcast %cst_30 : f32 to vector<1x32xf32>
    %129 = arith.subf %128, %122 : vector<1x32xf32>
    %130 = arith.mulf %129, %127 : vector<1x32xf32>
    %131 = arith.mulf %122, %99 : vector<1x32xf32>
    %132 = arith.addf %130, %131 : vector<1x32xf32>
    %133 = arith.index_cast %c3_i32 : i32 to index
    %c0_31 = arith.constant 0 : index
    %134 = vector.load %arg10[%133, %c0_31] : memref<8x32xf32, #tpu.memory_space<vmem>>, vector<1x32xf32>
    tpu.vector_store %arg10[%133, %c0_31], %132 {strides = array<i32>} : memref<8x32xf32, #tpu.memory_space<vmem>>, vector<1x32xf32>,
    %c4_i32 = arith.constant 4 : i32
    %135 = arith.index_cast %c4_i32 : i32 to index
    %136 = memref.load %arg1[%135] : memref<8xi32, #tpu.memory_space<smem>>
    %137 = arith.index_cast %136 : i32 to index
    %c0_32 = arith.constant 0 : index
    %138 = vector.load %arg2[%137, %c0_32] : memref<64x32xf32, #tpu.memory_space<vmem>>, vector<1x32xf32>
    %cst_33 = arith.constant 0.000000e+00 : f32
    %139 = vector.broadcast %cst_33 : f32 to vector<1x32xf32>
    %140 = arith.maximumf %138, %139 : vector<1x32xf32>
    %141 = tpu.concatenate %140, %132 in 1 : vector<1x32xf32>, vector<1x32xf32> -> vector<1x64xf32>
    %cst_34 = arith.constant dense<0.000000e+00> : vector<1x128xf32>
    %142 = tpu.matmul %141, %0, %cst_34 {dimension_numbers = #tpu.dot_dimension_numbers<[1], [0], [0], [1], [0, 0, 1, 1], [], []>} : vector<1x64xf32>, vector<64x128xf32>, vector<1x128xf32> -> vector<1x128xf32>
    %143 = arith.addf %142, %1 : vector<1x128xf32>
    %144 = vector.extract_strided_slice %143 {offsets = [0, 0], sizes = [1, 32], strides = [1, 1]} : vector<1x128xf32> to vector<1x32xf32>
    %145 = arith.negf %144 : vector<1x32xf32>
    %146 = math.exp %145 : vector<1x32xf32>
    %cst_35 = arith.constant 1.000000e+00 : f32
    %147 = vector.broadcast %cst_35 : f32 to vector<1x32xf32>
    %148 = arith.addf %147, %146 : vector<1x32xf32>
    %149 = arith.divf %147, %148 : vector<1x32xf32>
    %150 = vector.extract_strided_slice %143 {offsets = [0, 32], sizes = [1, 32], strides = [1, 1]} : vector<1x128xf32> to vector<1x32xf32>
    %151 = arith.negf %150 : vector<1x32xf32>
    %152 = math.exp %151 : vector<1x32xf32>
    %cst_36 = arith.constant 1.000000e+00 : f32
    %153 = vector.broadcast %cst_36 : f32 to vector<1x32xf32>
    %154 = arith.addf %153, %152 : vector<1x32xf32>
    %155 = arith.divf %153, %154 : vector<1x32xf32>
    %156 = vector.extract_strided_slice %143 {offsets = [0, 64], sizes = [1, 32], strides = [1, 1]} : vector<1x128xf32> to vector<1x32xf32>
    %157 = vector.extract_strided_slice %143 {offsets = [0, 96], sizes = [1, 32], strides = [1, 1]} : vector<1x128xf32> to vector<1x32xf32>
    %158 = arith.mulf %149, %157 : vector<1x32xf32>
    %159 = arith.addf %156, %158 : vector<1x32xf32>
    %160 = math.tanh %159 : vector<1x32xf32>
    %cst_37 = arith.constant 1.000000e+00 : f32
    %161 = vector.broadcast %cst_37 : f32 to vector<1x32xf32>
    %162 = arith.subf %161, %155 : vector<1x32xf32>
    %163 = arith.mulf %162, %160 : vector<1x32xf32>
    %164 = arith.mulf %155, %132 : vector<1x32xf32>
    %165 = arith.addf %163, %164 : vector<1x32xf32>
    %166 = arith.index_cast %c4_i32 : i32 to index
    %c0_38 = arith.constant 0 : index
    %167 = vector.load %arg10[%166, %c0_38] : memref<8x32xf32, #tpu.memory_space<vmem>>, vector<1x32xf32>
    tpu.vector_store %arg10[%166, %c0_38], %165 {strides = array<i32>} : memref<8x32xf32, #tpu.memory_space<vmem>>, vector<1x32xf32>,
    %c5_i32 = arith.constant 5 : i32
    %168 = arith.index_cast %c5_i32 : i32 to index
    %169 = memref.load %arg1[%168] : memref<8xi32, #tpu.memory_space<smem>>
    %170 = arith.index_cast %169 : i32 to index
    %c0_39 = arith.constant 0 : index
    %171 = vector.load %arg2[%170, %c0_39] : memref<64x32xf32, #tpu.memory_space<vmem>>, vector<1x32xf32>
    %cst_40 = arith.constant 0.000000e+00 : f32
    %172 = vector.broadcast %cst_40 : f32 to vector<1x32xf32>
    %173 = arith.maximumf %171, %172 : vector<1x32xf32>
    %174 = tpu.concatenate %173, %165 in 1 : vector<1x32xf32>, vector<1x32xf32> -> vector<1x64xf32>
    %cst_41 = arith.constant dense<0.000000e+00> : vector<1x128xf32>
    %175 = tpu.matmul %174, %0, %cst_41 {dimension_numbers = #tpu.dot_dimension_numbers<[1], [0], [0], [1], [0, 0, 1, 1], [], []>} : vector<1x64xf32>, vector<64x128xf32>, vector<1x128xf32> -> vector<1x128xf32>
    %176 = arith.addf %175, %1 : vector<1x128xf32>
    %177 = vector.extract_strided_slice %176 {offsets = [0, 0], sizes = [1, 32], strides = [1, 1]} : vector<1x128xf32> to vector<1x32xf32>
    %178 = arith.negf %177 : vector<1x32xf32>
    %179 = math.exp %178 : vector<1x32xf32>
    %cst_42 = arith.constant 1.000000e+00 : f32
    %180 = vector.broadcast %cst_42 : f32 to vector<1x32xf32>
    %181 = arith.addf %180, %179 : vector<1x32xf32>
    %182 = arith.divf %180, %181 : vector<1x32xf32>
    %183 = vector.extract_strided_slice %176 {offsets = [0, 32], sizes = [1, 32], strides = [1, 1]} : vector<1x128xf32> to vector<1x32xf32>
    %184 = arith.negf %183 : vector<1x32xf32>
    %185 = math.exp %184 : vector<1x32xf32>
    %cst_43 = arith.constant 1.000000e+00 : f32
    %186 = vector.broadcast %cst_43 : f32 to vector<1x32xf32>
    %187 = arith.addf %186, %185 : vector<1x32xf32>
    %188 = arith.divf %186, %187 : vector<1x32xf32>
    %189 = vector.extract_strided_slice %176 {offsets = [0, 64], sizes = [1, 32], strides = [1, 1]} : vector<1x128xf32> to vector<1x32xf32>
    %190 = vector.extract_strided_slice %176 {offsets = [0, 96], sizes = [1, 32], strides = [1, 1]} : vector<1x128xf32> to vector<1x32xf32>
    %191 = arith.mulf %182, %190 : vector<1x32xf32>
    %192 = arith.addf %189, %191 : vector<1x32xf32>
    %193 = math.tanh %192 : vector<1x32xf32>
    %cst_44 = arith.constant 1.000000e+00 : f32
    %194 = vector.broadcast %cst_44 : f32 to vector<1x32xf32>
    %195 = arith.subf %194, %188 : vector<1x32xf32>
    %196 = arith.mulf %195, %193 : vector<1x32xf32>
    %197 = arith.mulf %188, %165 : vector<1x32xf32>
    %198 = arith.addf %196, %197 : vector<1x32xf32>
    %199 = arith.index_cast %c5_i32 : i32 to index
    %c0_45 = arith.constant 0 : index
    %200 = vector.load %arg10[%199, %c0_45] : memref<8x32xf32, #tpu.memory_space<vmem>>, vector<1x32xf32>
    tpu.vector_store %arg10[%199, %c0_45], %198 {strides = array<i32>} : memref<8x32xf32, #tpu.memory_space<vmem>>, vector<1x32xf32>,
    %c6_i32 = arith.constant 6 : i32
    %201 = arith.index_cast %c6_i32 : i32 to index
    %202 = memref.load %arg1[%201] : memref<8xi32, #tpu.memory_space<smem>>
    %203 = arith.index_cast %202 : i32 to index
    %c0_46 = arith.constant 0 : index
    %204 = vector.load %arg2[%203, %c0_46] : memref<64x32xf32, #tpu.memory_space<vmem>>, vector<1x32xf32>
    %cst_47 = arith.constant 0.000000e+00 : f32
    %205 = vector.broadcast %cst_47 : f32 to vector<1x32xf32>
    %206 = arith.maximumf %204, %205 : vector<1x32xf32>
    %207 = tpu.concatenate %206, %198 in 1 : vector<1x32xf32>, vector<1x32xf32> -> vector<1x64xf32>
    %cst_48 = arith.constant dense<0.000000e+00> : vector<1x128xf32>
    %208 = tpu.matmul %207, %0, %cst_48 {dimension_numbers = #tpu.dot_dimension_numbers<[1], [0], [0], [1], [0, 0, 1, 1], [], []>} : vector<1x64xf32>, vector<64x128xf32>, vector<1x128xf32> -> vector<1x128xf32>
    %209 = arith.addf %208, %1 : vector<1x128xf32>
    %210 = vector.extract_strided_slice %209 {offsets = [0, 0], sizes = [1, 32], strides = [1, 1]} : vector<1x128xf32> to vector<1x32xf32>
    %211 = arith.negf %210 : vector<1x32xf32>
    %212 = math.exp %211 : vector<1x32xf32>
    %cst_49 = arith.constant 1.000000e+00 : f32
    %213 = vector.broadcast %cst_49 : f32 to vector<1x32xf32>
    %214 = arith.addf %213, %212 : vector<1x32xf32>
    %215 = arith.divf %213, %214 : vector<1x32xf32>
    %216 = vector.extract_strided_slice %209 {offsets = [0, 32], sizes = [1, 32], strides = [1, 1]} : vector<1x128xf32> to vector<1x32xf32>
    %217 = arith.negf %216 : vector<1x32xf32>
    %218 = math.exp %217 : vector<1x32xf32>
    %cst_50 = arith.constant 1.000000e+00 : f32
    %219 = vector.broadcast %cst_50 : f32 to vector<1x32xf32>
    %220 = arith.addf %219, %218 : vector<1x32xf32>
    %221 = arith.divf %219, %220 : vector<1x32xf32>
    %222 = vector.extract_strided_slice %209 {offsets = [0, 64], sizes = [1, 32], strides = [1, 1]} : vector<1x128xf32> to vector<1x32xf32>
    %223 = vector.extract_strided_slice %209 {offsets = [0, 96], sizes = [1, 32], strides = [1, 1]} : vector<1x128xf32> to vector<1x32xf32>
    %224 = arith.mulf %215, %223 : vector<1x32xf32>
    %225 = arith.addf %222, %224 : vector<1x32xf32>
    %226 = math.tanh %225 : vector<1x32xf32>
    %cst_51 = arith.constant 1.000000e+00 : f32
    %227 = vector.broadcast %cst_51 : f32 to vector<1x32xf32>
    %228 = arith.subf %227, %221 : vector<1x32xf32>
    %229 = arith.mulf %228, %226 : vector<1x32xf32>
    %230 = arith.mulf %221, %198 : vector<1x32xf32>
    %231 = arith.addf %229, %230 : vector<1x32xf32>
    %232 = arith.index_cast %c6_i32 : i32 to index
    %c0_52 = arith.constant 0 : index
    %233 = vector.load %arg10[%232, %c0_52] : memref<8x32xf32, #tpu.memory_space<vmem>>, vector<1x32xf32>
    tpu.vector_store %arg10[%232, %c0_52], %231 {strides = array<i32>} : memref<8x32xf32, #tpu.memory_space<vmem>>, vector<1x32xf32>,
    %c7_i32 = arith.constant 7 : i32
    %234 = arith.index_cast %c7_i32 : i32 to index
    %235 = memref.load %arg1[%234] : memref<8xi32, #tpu.memory_space<smem>>
    %236 = arith.index_cast %235 : i32 to index
    %c0_53 = arith.constant 0 : index
    %237 = vector.load %arg2[%236, %c0_53] : memref<64x32xf32, #tpu.memory_space<vmem>>, vector<1x32xf32>
    %cst_54 = arith.constant 0.000000e+00 : f32
    %238 = vector.broadcast %cst_54 : f32 to vector<1x32xf32>
    %239 = arith.maximumf %237, %238 : vector<1x32xf32>
    %240 = tpu.concatenate %239, %231 in 1 : vector<1x32xf32>, vector<1x32xf32> -> vector<1x64xf32>
    %cst_55 = arith.constant dense<0.000000e+00> : vector<1x128xf32>
    %241 = tpu.matmul %240, %0, %cst_55 {dimension_numbers = #tpu.dot_dimension_numbers<[1], [0], [0], [1], [0, 0, 1, 1], [], []>} : vector<1x64xf32>, vector<64x128xf32>, vector<1x128xf32> -> vector<1x128xf32>
    %242 = arith.addf %241, %1 : vector<1x128xf32>
    %243 = vector.extract_strided_slice %242 {offsets = [0, 0], sizes = [1, 32], strides = [1, 1]} : vector<1x128xf32> to vector<1x32xf32>
    %244 = arith.negf %243 : vector<1x32xf32>
    %245 = math.exp %244 : vector<1x32xf32>
    %cst_56 = arith.constant 1.000000e+00 : f32
    %246 = vector.broadcast %cst_56 : f32 to vector<1x32xf32>
    %247 = arith.addf %246, %245 : vector<1x32xf32>
    %248 = arith.divf %246, %247 : vector<1x32xf32>
    %249 = vector.extract_strided_slice %242 {offsets = [0, 32], sizes = [1, 32], strides = [1, 1]} : vector<1x128xf32> to vector<1x32xf32>
    %250 = arith.negf %249 : vector<1x32xf32>
    %251 = math.exp %250 : vector<1x32xf32>
    %cst_57 = arith.constant 1.000000e+00 : f32
    %252 = vector.broadcast %cst_57 : f32 to vector<1x32xf32>
    %253 = arith.addf %252, %251 : vector<1x32xf32>
    %254 = arith.divf %252, %253 : vector<1x32xf32>
    %255 = vector.extract_strided_slice %242 {offsets = [0, 64], sizes = [1, 32], strides = [1, 1]} : vector<1x128xf32> to vector<1x32xf32>
    %256 = vector.extract_strided_slice %242 {offsets = [0, 96], sizes = [1, 32], strides = [1, 1]} : vector<1x128xf32> to vector<1x32xf32>
    %257 = arith.mulf %248, %256 : vector<1x32xf32>
    %258 = arith.addf %255, %257 : vector<1x32xf32>
    %259 = math.tanh %258 : vector<1x32xf32>
    %cst_58 = arith.constant 1.000000e+00 : f32
    %260 = vector.broadcast %cst_58 : f32 to vector<1x32xf32>
    %261 = arith.subf %260, %254 : vector<1x32xf32>
    %262 = arith.mulf %261, %259 : vector<1x32xf32>
    %263 = arith.mulf %254, %231 : vector<1x32xf32>
    %264 = arith.addf %262, %263 : vector<1x32xf32>
    %265 = arith.index_cast %c7_i32 : i32 to index
    %c0_59 = arith.constant 0 : index
    %266 = vector.load %arg10[%265, %c0_59] : memref<8x32xf32, #tpu.memory_space<vmem>>, vector<1x32xf32>
    tpu.vector_store %arg10[%265, %c0_59], %264 {strides = array<i32>} : memref<8x32xf32, #tpu.memory_space<vmem>>, vector<1x32xf32>,
    %c8_i32 = arith.constant 8 : i32
    %c0_60 = arith.constant 0 : index
    %c0_61 = arith.constant 0 : index
    %267 = vector.load %arg9[%c0_60, %c0_61] : memref<1x32xf32, #tpu.memory_space<vmem>>, vector<1x32xf32>
    tpu.vector_store %arg9[%c0_60, %c0_61], %264 {strides = array<i32>} : memref<1x32xf32, #tpu.memory_space<vmem>>, vector<1x32xf32>,
    %c0_62 = arith.constant 0 : index
    %c0_63 = arith.constant 0 : index
    %268 = vector.load %arg10[%c0_62, %c0_63] : memref<8x32xf32, #tpu.memory_space<vmem>>, vector<8x32xf32>
    %c0_64 = arith.constant 0 : index
    %c0_65 = arith.constant 0 : index
    %269 = vector.load %arg6[%c0_64, %c0_65] : memref<32x128xf32, #tpu.memory_space<vmem>>, vector<32x128xf32>
    %cst_66 = arith.constant dense<0.000000e+00> : vector<8x128xf32>
    %270 = tpu.matmul %268, %269, %cst_66 {dimension_numbers = #tpu.dot_dimension_numbers<[1], [0], [0], [1], [0, 0, 1, 1], [], []>} : vector<8x32xf32>, vector<32x128xf32>, vector<8x128xf32> -> vector<8x128xf32>
    %c0_67 = arith.constant 0 : index
    %c0_68 = arith.constant 0 : index
    %271 = vector.load %arg7[%c0_67, %c0_68] : memref<1x128xf32, #tpu.memory_space<vmem>>, vector<1x128xf32>
    %272 = vector.broadcast %271 : vector<1x128xf32> to vector<8x128xf32>
    %273 = arith.addf %270, %272 : vector<8x128xf32>
    %c0_69 = arith.constant 0 : index
    %c0_70 = arith.constant 0 : index
    %274 = vector.load %arg8[%c0_69, %c0_70] : memref<8x128xf32, #tpu.memory_space<vmem>>, vector<8x128xf32>
    tpu.vector_store %arg8[%c0_69, %c0_70], %273 {strides = array<i32>} : memref<8x128xf32, #tpu.memory_space<vmem>>, vector<8x128xf32>,
    return
  }
  func.func @transform_0(%arg0: i32, %arg1: memref<8xi32, #tpu.memory_space<smem>>) -> (i32, i32) {
    %c0_i32 = arith.constant 0 : i32
    %c0_i32_0 = arith.constant 0 : i32
    %c0_i32_1 = arith.constant 0 : i32
    return %c0_i32, %c0_i32_0 : i32, i32
  }
  func.func @transform_1(%arg0: i32, %arg1: memref<8xi32, #tpu.memory_space<smem>>) -> (i32, i32) {
    %c0_i32 = arith.constant 0 : i32
    %c0_i32_0 = arith.constant 0 : i32
    %c0_i32_1 = arith.constant 0 : i32
    return %c0_i32, %c0_i32_0 : i32, i32
  }
  func.func @transform_2(%arg0: i32, %arg1: memref<8xi32, #tpu.memory_space<smem>>) -> (i32, i32) {
    %c0_i32 = arith.constant 0 : i32
    %c0_i32_0 = arith.constant 0 : i32
    %c0_i32_1 = arith.constant 0 : i32
    return %c0_i32, %c0_i32_0 : i32, i32
  }
  func.func @transform_3(%arg0: i32, %arg1: memref<8xi32, #tpu.memory_space<smem>>) -> (i32, i32) {
    %c0_i32 = arith.constant 0 : i32
    %c0_i32_0 = arith.constant 0 : i32
    %c0_i32_1 = arith.constant 0 : i32
    return %c0_i32, %c0_i32_0 : i32, i32
  }
  func.func @transform_4(%arg0: i32, %arg1: memref<8xi32, #tpu.memory_space<smem>>) -> (i32, i32) {
    %c0_i32 = arith.constant 0 : i32
    %c0_i32_0 = arith.constant 0 : i32
    %c0_i32_1 = arith.constant 0 : i32
    return %c0_i32, %c0_i32_0 : i32, i32
  }
  func.func @transform_5(%arg0: i32, %arg1: memref<8xi32, #tpu.memory_space<smem>>) -> (i32, i32) {
    %c0_i32 = arith.constant 0 : i32
    %c0_i32_0 = arith.constant 0 : i32
    %c0_i32_1 = arith.constant 0 : i32
    return %c0_i32, %c0_i32_0 : i32, i32
  }
  func.func @transform_6(%arg0: i32, %arg1: memref<8xi32, #tpu.memory_space<smem>>) -> (i32, i32) {
    %c0_i32 = arith.constant 0 : i32
    %c0_i32_0 = arith.constant 0 : i32
    %c0_i32_1 = arith.constant 0 : i32
    return %c0_i32, %c0_i32_0 : i32, i32
  }
  func.func @transform_7(%arg0: i32, %arg1: memref<8xi32, #tpu.memory_space<smem>>) -> (i32, i32) {
    %c0_i32 = arith.constant 0 : i32
    %c0_i32_0 = arith.constant 0 : i32
    %c0_i32_1 = arith.constant 0 : i32
    return %c0_i32, %c0_i32_0 : i32, i32
  }
}

</mosaic_0001>

<llo_original>
// kernel: decoder_decode.1
$region0: #{decoder_decode.1}
  #allocation0 [shape = 'u32[]', space=smem, size = 0x4, offset = 0x4, fixed_abs, tag = 'smem constant byte address 0x4 - core index']
  #allocation1 [shape = 'u32[72,128]{1,0:T(1,128)}', space=vmem, size = 0x9000, scoped, tag = 'internal scratch']
  #allocation2 [shape = 'f32[8,32]{1,0:T(8,128)}', space=vmem, size = 0x1000, scoped, tag = 'scratch operand']
  #allocation3 [shape = 's32[1]{0}', space=sflag, size = 0x4, scoped, tag = 'scoped memory for decoder_decode.1']
  #allocation4 [shape = 'u8[512]{0}', space=smem, size = 0x200, scoped, tag = 'prefetched SMEM operand 0']
  %s0 = inlined_call_operand.vmem [shape: s32[8], index: 0, kind: input, shape index: {}]
  %s1 = inlined_call_operand.vmem [shape: f32[64,32], index: 1, kind: input, shape index: {}]
  %s2 = inlined_call_operand.vmem [shape: f32[1,32], index: 2, kind: input, shape index: {}]
  %s3 = inlined_call_operand.vmem [shape: f32[64,128], index: 3, kind: input, shape index: {}]
  %s4 = inlined_call_operand.vmem [shape: f32[1,128], index: 4, kind: input, shape index: {}]
  %s5 = inlined_call_operand.vmem [shape: f32[32,128], index: 5, kind: input, shape index: {}]
  %s6 = inlined_call_operand.vmem [shape: f32[1,128], index: 6, kind: input, shape index: {}]
  %s7 = inlined_call_operand.vmem [shape: f32[8,128], index: 7, kind: output, shape index: {0}]
  %s8 = inlined_call_operand.hbm [shape: f32[1,32], index: 8, kind: output, shape index: {1}]
  %9 = xla_tuple %s7, %s8
  %s10 = sld [smem:[#allocation0]]
  $region42: #{decoder_decode.1} parent=0
    _
  %s12 = ssub.s32 1, %s10
  %s13 = scalar_select 0, %s12, %s10
  %s15 = sshll.u32 %s0, 4
  %s16 = int_to_ptr.vmem [resolvable:$true] %s15
  %18 = dma.vmem_to_smem %s16, 16, [#allocation4], [#allocation3]
  %20 = dma.done [#allocation3], 16
  %21 = sfence
  $region1: #{decoder_decode.1} parent=0
    #allocation5 [shape = 'u8[512]{0}', space=vmem, size = 0x400, scoped, tag = 'output window, operand 1, single buffered']
    #allocation6 [shape = 's32[1]{0}', space=sflag, size = 0x4, scoped, tag = 'scoped memory for decoder_decode.1']
    %22 = vsyncpa [#allocation6], 0
    // Predicated region
    $region2: #{decoder_decode.1} parent=1 // pred_check
      _
    $region3: #{decoder_decode.1} parent=1 // pred_check_branch
      %24 = sbr.rel (0) target = $region5
    $region4: #{decoder_decode.1} parent=1 // pred_region
      _
    $region5: #{decoder_decode.1} parent=1 // pred_fallthru
      _
    // Predicated region
    $region6: #{decoder_decode.1} parent=1 // pred_check
      _
    $region7: #{decoder_decode.1} parent=1 // pred_check_branch
      %26 = sbr.rel (0) target = $region9
    $region8: #{decoder_decode.1} parent=1 // pred_region
      _
    $region9: #{decoder_decode.1} parent=1 // pred_fallthru
      _
    // Predicated region
    $region10: #{decoder_decode.1} parent=1 // pred_check
      _
    $region11: #{decoder_decode.1} parent=1 // pred_check_branch
      %28 = sbr.rel (0) target = $region13
    $region12: #{decoder_decode.1} parent=1 // pred_region
      _
    $region13: #{decoder_decode.1} parent=1 // pred_fallthru
      _
    // Predicated region
    $region14: #{decoder_decode.1} parent=1 // pred_check
      _
    $region15: #{decoder_decode.1} parent=1 // pred_check_branch
      %30 = sbr.rel (0) target = $region17
    $region16: #{decoder_decode.1} parent=1 // pred_region
      _
    $region17: #{decoder_decode.1} parent=1 // pred_fallthru
      _
    // Predicated region
    $region18: #{decoder_decode.1} parent=1 // pred_check
      _
    $region19: #{decoder_decode.1} parent=1 // pred_check_branch
      %32 = sbr.rel (0) target = $region21
    $region20: #{decoder_decode.1} parent=1 // pred_region
      _
    $region21: #{decoder_decode.1} parent=1 // pred_fallthru
      _
    // Predicated region
    $region22: #{decoder_decode.1} parent=1 // pred_check
      _
    $region23: #{decoder_decode.1} parent=1 // pred_check_branch
      %34 = sbr.rel (0) target = $region25
    $region24: #{decoder_decode.1} parent=1 // pred_region
      _
    $region25: #{decoder_decode.1} parent=1 // pred_fallthru
      _
    %v35 = vld [vmem:[%s3] sm:$0xff]
    %v36 = vld [vmem:[%s3 + $0x8] sm:$0xff]
    %v37 = vld [vmem:[%s3 + $0x10] sm:$0xff]
    %v38 = vld [vmem:[%s3 + $0x18] sm:$0xff]
    %v39 = vld [vmem:[%s3 + $0x20] sm:$0xff]
    %v40 = vld [vmem:[%s3 + $0x28] sm:$0xff]
    %v41 = vld [vmem:[%s3 + $0x30] sm:$0xff]
    %v42 = vld [vmem:[%s3 + $0x38] sm:$0xff]
    %v43 = vld [vmem:[%s4] sm:$0x1]
    %v44 = vld [vmem:[%s2] sm:$0x1]
    %s45 = sld [smem:[#allocation4]]
    %s46 = scalar_lea.vmem %s1, %s45
    %v47 = vld [vmem:[%s46] sm:$0x1]
    %v48 = vmax.f32 %v47, 0.0
    %v50 = vperm.slane %v44, 0
    %51 = vrot.lane.b32.xlu0 %v50, 32
    %v52 = vpop.permute.xlu0 %51
    %vm54 = vcmask 261120
    %v55 = vsel %vm54, %v48, %v52
    %vm56 = vcmask 523264
    %v58 = vsel %vm56, %v55, 0
    %60 = vmatpush.msra.mxu0 0.0
    %61 = vmatpush.msra.mxu0 0.0
    %62 = vmatpush.msra.mxu0 0.0
    %63 = vmatpush.msra.mxu0 0.0
    %64 = vmatpush.msra.mxu0 0.0
    %65 = vmatpush.msra.mxu0 0.0
    %66 = vmatpush.msra.mxu0 0.0
    %67 = vmatpush.msra.mxu0 0.0
    %68 = vmatpush.msra.mxu0 %v42
    %69 = vmatpush.msra.mxu0 %v41
    %70 = vmatpush.msra.mxu0 %v40
    %71 = vmatpush.msra.mxu0 %v39
    %72 = vmatpush.msra.mxu0 %v38
    %73 = vmatpush.msra.mxu0 %v37
    %74 = vmatpush.msra.mxu0 %v36
    %75 = vmatpush.msra.mxu0 %v35
    %76 = vmatmul.f32.gmra.mxu0 %v58
    %v77 = vpop.f32.mrf.mxu0
    %v78 = vadd.f32 %v43, %v77
    %79 = vdwg.mxu0
    %v80 = vxor.u32 %v78, 2147483648
    %v81 = vmul.f32 %v80, 1.442695
    %v82 = vpow.pop %v81
    %v83 = vadd.f32 %v82, 1.0
    %v84 = vrcp.pop %v83
    %v85 = vmul.f32 %v83, %v84
    %v86 = vsub.f32 1.0, %v85
    %v87 = vmul.f32 %v84, %v86
    %v88 = vadd.f32 %v84, %v87
    %vm89 = vweird.f32 %v83
    %vm90 = vweird.f32 %v84
    %vm91 = vmor %vm89, %vm90
    %v92 = vsel %vm91, %v84, %v88
    %v93 = vand.u32 2147483647, %v83
    %vm94 = vcmp.eq.f32.partialorder %v93, 8.507059e+37
    %v95 = vand.u32 %v83, 2147483648
    %v96 = vor.u32 1.1754944e-38, %v95
    %v97 = vsel %vm94, %v96, %v92
    %v98 = vmul.f32 1.0, %v97
    %100 = vrot.lane.b32.xlu0 %v78, 32
    %v101 = vpop.permute.xlu0 %100
    %v103 = vmul.f32 %v98, %v101
    %105 = vrot.lane.b32.xlu0 %v103, 64
    %v106 = vpop.permute.xlu0 %105
    %v108 = vadd.f32 %v78, %v106
    %v109 = vtanh.pop %v108
    %v110 = vsub.f32 1.0, %v98
    %112 = vrot.lane.b32.xlu0 %v109, 96
    %v113 = vpop.permute.xlu0 %112
    %v115 = vmul.f32 %v110, %v113
    %v116 = vmul.f32 %v98, %v52
    %v117 = vadd.f32 %v115, %v116
    %119 = vrot.lane.b32.xlu0 %v117, 96
    %v120 = vpop.permute.xlu0 %119
    %vm122 = vcmask 253952
    %123 = vst.msk [vmem:[#allocation2] sm:$0x1] %vm122, %v120
    %s124 = sld [smem:[#allocation4 + $0x1]]
    %s125 = scalar_lea.vmem %s1, %s124
    %v126 = vld [vmem:[%s125] sm:$0x1]
    %v127 = vmax.f32 %v126, 0.0
    %v128 = vsel %vm54, %v127, %v117
    %v130 = vsel %vm56, %v128, 0
    %132 = vmatpush.msra.mxu0 0.0
    %133 = vmatpush.msra.mxu0 0.0
    %134 = vmatpush.msra.mxu0 0.0
    %135 = vmatpush.msra.mxu0 0.0
    %136 = vmatpush.msra.mxu0 0.0
    %137 = vmatpush.msra.mxu0 0.0
    %138 = vmatpush.msra.mxu0 0.0
    %139 = vmatpush.msra.mxu0 0.0
    %140 = vmatpush.msra.mxu0 %v42
    %141 = vmatpush.msra.mxu0 %v41
    %142 = vmatpush.msra.mxu0 %v40
    %143 = vmatpush.msra.mxu0 %v39
    %144 = vmatpush.msra.mxu0 %v38
    %145 = vmatpush.msra.mxu0 %v37
    %146 = vmatpush.msra.mxu0 %v36
    %147 = vmatpush.msra.mxu0 %v35
    %148 = vmatmul.f32.gmra.mxu0 %v130
    %v149 = vpop.f32.mrf.mxu0
    %v150 = vadd.f32 %v43, %v149
    %151 = vdwg.mxu0
    %v152 = vxor.u32 %v150, 2147483648
    %v153 = vmul.f32 %v152, 1.442695
    %v154 = vpow.pop %v153
    %v155 = vadd.f32 %v154, 1.0
    %v156 = vrcp.pop %v155
    %v157 = vmul.f32 %v155, %v156
    %v158 = vsub.f32 1.0, %v157
    %v159 = vmul.f32 %v156, %v158
    %v160 = vadd.f32 %v156, %v159
    %vm161 = vweird.f32 %v155
    %vm162 = vweird.f32 %v156
    %vm163 = vmor %vm161, %vm162
    %v164 = vsel %vm163, %v156, %v160
    %v165 = vand.u32 2147483647, %v155
    %vm166 = vcmp.eq.f32.partialorder %v165, 8.507059e+37
    %v167 = vand.u32 %v155, 2147483648
    %v168 = vor.u32 1.1754944e-38, %v167
    %v169 = vsel %vm166, %v168, %v164
    %v170 = vmul.f32 1.0, %v169
    %172 = vrot.lane.b32.xlu0 %v150, 32
    %v173 = vpop.permute.xlu0 %172
    %v175 = vmul.f32 %v170, %v173
    %177 = vrot.lane.b32.xlu0 %v175, 64
    %v178 = vpop.permute.xlu0 %177
    %v180 = vadd.f32 %v150, %v178
    %v181 = vtanh.pop %v180
    %v182 = vsub.f32 1.0, %v170
    %184 = vrot.lane.b32.xlu0 %v181, 96
    %v185 = vpop.permute.xlu0 %184
    %v187 = vmul.f32 %v182, %v185
    %v188 = vmul.f32 %v170, %v117
    %v189 = vadd.f32 %v187, %v188
    %191 = vrot.lane.b32.xlu0 %v189, 96
    %v192 = vpop.permute.xlu0 %191
    %194 = vst.msk [vmem:[#allocation2 + $0x1] sm:$0x1] %vm122, %v192
    %s195 = sld [smem:[#allocation4 + $0x2]]
    %s196 = scalar_lea.vmem %s1, %s195
    %v197 = vld [vmem:[%s196] sm:$0x1]
    %v198 = vmax.f32 %v197, 0.0
    %v199 = vsel %vm54, %v198, %v189
    %v201 = vsel %vm56, %v199, 0
    %203 = vmatpush.msra.mxu0 0.0
    %204 = vmatpush.msra.mxu0 0.0
    %205 = vmatpush.msra.mxu0 0.0
    %206 = vmatpush.msra.mxu0 0.0
    %207 = vmatpush.msra.mxu0 0.0
    %208 = vmatpush.msra.mxu0 0.0
    %209 = vmatpush.msra.mxu0 0.0
    %210 = vmatpush.msra.mxu0 0.0
    %211 = vmatpush.msra.mxu0 %v42
    %212 = vmatpush.msra.mxu0 %v41
    %213 = vmatpush.msra.mxu0 %v40
    %214 = vmatpush.msra.mxu0 %v39
    %215 = vmatpush.msra.mxu0 %v38
    %216 = vmatpush.msra.mxu0 %v37
    %217 = vmatpush.msra.mxu0 %v36
    %218 = vmatpush.msra.mxu0 %v35
    %219 = vmatmul.f32.gmra.mxu0 %v201
    %v220 = vpop.f32.mrf.mxu0
    %v221 = vadd.f32 %v43, %v220
    %222 = vdwg.mxu0
    %v223 = vxor.u32 %v221, 2147483648
    %v224 = vmul.f32 %v223, 1.442695
    %v225 = vpow.pop %v224
    %v226 = vadd.f32 %v225, 1.0
    %v227 = vrcp.pop %v226
    %v228 = vmul.f32 %v226, %v227
    %v229 = vsub.f32 1.0, %v228
    %v230 = vmul.f32 %v227, %v229
    %v231 = vadd.f32 %v227, %v230
    %vm232 = vweird.f32 %v226
    %vm233 = vweird.f32 %v227
    %vm234 = vmor %vm232, %vm233
    %v235 = vsel %vm234, %v227, %v231
    %v236 = vand.u32 2147483647, %v226
    %vm237 = vcmp.eq.f32.partialorder %v236, 8.507059e+37
    %v238 = vand.u32 %v226, 2147483648
    %v239 = vor.u32 1.1754944e-38, %v238
    %v240 = vsel %vm237, %v239, %v235
    %v241 = vmul.f32 1.0, %v240
    %243 = vrot.lane.b32.xlu0 %v221, 32
    %v244 = vpop.permute.xlu0 %243
    %v246 = vmul.f32 %v241, %v244
    %248 = vrot.lane.b32.xlu0 %v246, 64
    %v249 = vpop.permute.xlu0 %248
    %v251 = vadd.f32 %v221, %v249
    %v252 = vtanh.pop %v251
    %v253 = vsub.f32 1.0, %v241
    %255 = vrot.lane.b32.xlu0 %v252, 96
    %v256 = vpop.permute.xlu0 %255
    %v258 = vmul.f32 %v253, %v256
    %v259 = vmul.f32 %v241, %v189
    %v260 = vadd.f32 %v258, %v259
    %262 = vrot.lane.b32.xlu0 %v260, 96
    %v263 = vpop.permute.xlu0 %262
    %265 = vst.msk [vmem:[#allocation2 + $0x2] sm:$0x1] %vm122, %v263
    %s266 = sld [smem:[#allocation4 + $0x3]]
    %s267 = scalar_lea.vmem %s1, %s266
    %v268 = vld [vmem:[%s267] sm:$0x1]
    %v269 = vmax.f32 %v268, 0.0
    %v270 = vsel %vm54, %v269, %v260
    %v272 = vsel %vm56, %v270, 0
    %274 = vmatpush.msra.mxu0 0.0
    %275 = vmatpush.msra.mxu0 0.0
    %276 = vmatpush.msra.mxu0 0.0
    %277 = vmatpush.msra.mxu0 0.0
    %278 = vmatpush.msra.mxu0 0.0
    %279 = vmatpush.msra.mxu0 0.0
    %280 = vmatpush.msra.mxu0 0.0
    %281 = vmatpush.msra.mxu0 0.0
    %282 = vmatpush.msra.mxu0 %v42
    %283 = vmatpush.msra.mxu0 %v41
    %284 = vmatpush.msra.mxu0 %v40
    %285 = vmatpush.msra.mxu0 %v39
    %286 = vmatpush.msra.mxu0 %v38
    %287 = vmatpush.msra.mxu0 %v37
    %288 = vmatpush.msra.mxu0 %v36
    %289 = vmatpush.msra.mxu0 %v35
    %290 = vmatmul.f32.gmra.mxu0 %v272
    %v291 = vpop.f32.mrf.mxu0
    %v292 = vadd.f32 %v43, %v291
    %293 = vdwg.mxu0
    %v294 = vxor.u32 %v292, 2147483648
    %v295 = vmul.f32 %v294, 1.442695
    %v296 = vpow.pop %v295
    %v297 = vadd.f32 %v296, 1.0
    %v298 = vrcp.pop %v297
    %v299 = vmul.f32 %v297, %v298
    %v300 = vsub.f32 1.0, %v299
    %v301 = vmul.f32 %v298, %v300
    %v302 = vadd.f32 %v298, %v301
    %vm303 = vweird.f32 %v297
    %vm304 = vweird.f32 %v298
    %vm305 = vmor %vm303, %vm304
    %v306 = vsel %vm305, %v298, %v302
    %v307 = vand.u32 2147483647, %v297
    %vm308 = vcmp.eq.f32.partialorder %v307, 8.507059e+37
    %v309 = vand.u32 %v297, 2147483648
    %v310 = vor.u32 1.1754944e-38, %v309
    %v311 = vsel %vm308, %v310, %v306
    %v312 = vmul.f32 1.0, %v311
    %314 = vrot.lane.b32.xlu0 %v292, 32
    %v315 = vpop.permute.xlu0 %314
    %v317 = vmul.f32 %v312, %v315
    %319 = vrot.lane.b32.xlu0 %v317, 64
    %v320 = vpop.permute.xlu0 %319
    %v322 = vadd.f32 %v292, %v320
    %v323 = vtanh.pop %v322
    %v324 = vsub.f32 1.0, %v312
    %326 = vrot.lane.b32.xlu0 %v323, 96
    %v327 = vpop.permute.xlu0 %326
    %v329 = vmul.f32 %v324, %v327
    %v330 = vmul.f32 %v312, %v260
    %v331 = vadd.f32 %v329, %v330
    %333 = vrot.lane.b32.xlu0 %v331, 96
    %v334 = vpop.permute.xlu0 %333
    %336 = vst.msk [vmem:[#allocation2 + $0x3] sm:$0x1] %vm122, %v334
    %s337 = sld [smem:[#allocation4 + $0x4]]
    %s338 = scalar_lea.vmem %s1, %s337
    %v339 = vld [vmem:[%s338] sm:$0x1]
    %v340 = vmax.f32 %v339, 0.0
    %v341 = vsel %vm54, %v340, %v331
    %v343 = vsel %vm56, %v341, 0
    %345 = vmatpush.msra.mxu0 0.0
    %346 = vmatpush.msra.mxu0 0.0
    %347 = vmatpush.msra.mxu0 0.0
    %348 = vmatpush.msra.mxu0 0.0
    %349 = vmatpush.msra.mxu0 0.0
    %350 = vmatpush.msra.mxu0 0.0
    %351 = vmatpush.msra.mxu0 0.0
    %352 = vmatpush.msra.mxu0 0.0
    %353 = vmatpush.msra.mxu0 %v42
    %354 = vmatpush.msra.mxu0 %v41
    %355 = vmatpush.msra.mxu0 %v40
    %356 = vmatpush.msra.mxu0 %v39
    %357 = vmatpush.msra.mxu0 %v38
    %358 = vmatpush.msra.mxu0 %v37
    %359 = vmatpush.msra.mxu0 %v36
    %360 = vmatpush.msra.mxu0 %v35
    %361 = vmatmul.f32.gmra.mxu0 %v343
    %v362 = vpop.f32.mrf.mxu0
    %v363 = vadd.f32 %v43, %v362
    %364 = vdwg.mxu0
    %v365 = vxor.u32 %v363, 2147483648
    %v366 = vmul.f32 %v365, 1.442695
    %v367 = vpow.pop %v366
    %v368 = vadd.f32 %v367, 1.0
    %v369 = vrcp.pop %v368
    %v370 = vmul.f32 %v368, %v369
    %v371 = vsub.f32 1.0, %v370
    %v372 = vmul.f32 %v369, %v371
    %v373 = vadd.f32 %v369, %v372
    %vm374 = vweird.f32 %v368
    %vm375 = vweird.f32 %v369
    %vm376 = vmor %vm374, %vm375
    %v377 = vsel %vm376, %v369, %v373
    %v378 = vand.u32 2147483647, %v368
    %vm379 = vcmp.eq.f32.partialorder %v378, 8.507059e+37
    %v380 = vand.u32 %v368, 2147483648
    %v381 = vor.u32 1.1754944e-38, %v380
    %v382 = vsel %vm379, %v381, %v377
    %v383 = vmul.f32 1.0, %v382
    %385 = vrot.lane.b32.xlu0 %v363, 32
    %v386 = vpop.permute.xlu0 %385
    %v388 = vmul.f32 %v383, %v386
    %390 = vrot.lane.b32.xlu0 %v388, 64
    %v391 = vpop.permute.xlu0 %390
    %v393 = vadd.f32 %v363, %v391
    %v394 = vtanh.pop %v393
    %v395 = vsub.f32 1.0, %v383
    %397 = vrot.lane.b32.xlu0 %v394, 96
    %v398 = vpop.permute.xlu0 %397
    %v400 = vmul.f32 %v395, %v398
    %v401 = vmul.f32 %v383, %v331
    %v402 = vadd.f32 %v400, %v401
    %404 = vrot.lane.b32.xlu0 %v402, 96
    %v405 = vpop.permute.xlu0 %404
    %407 = vst.msk [vmem:[#allocation2 + $0x4] sm:$0x1] %vm122, %v405
    %s408 = sld [smem:[#allocation4 + $0x5]]
    %s409 = scalar_lea.vmem %s1, %s408
    %v410 = vld [vmem:[%s409] sm:$0x1]
    %v411 = vmax.f32 %v410, 0.0
    %v412 = vsel %vm54, %v411, %v402
    %v414 = vsel %vm56, %v412, 0
    %416 = vmatpush.msra.mxu0 0.0
    %417 = vmatpush.msra.mxu0 0.0
    %418 = vmatpush.msra.mxu0 0.0
    %419 = vmatpush.msra.mxu0 0.0
    %420 = vmatpush.msra.mxu0 0.0
    %421 = vmatpush.msra.mxu0 0.0
    %422 = vmatpush.msra.mxu0 0.0
    %423 = vmatpush.msra.mxu0 0.0
    %424 = vmatpush.msra.mxu0 %v42
    %425 = vmatpush.msra.mxu0 %v41
    %426 = vmatpush.msra.mxu0 %v40
    %427 = vmatpush.msra.mxu0 %v39
    %428 = vmatpush.msra.mxu0 %v38
    %429 = vmatpush.msra.mxu0 %v37
    %430 = vmatpush.msra.mxu0 %v36
    %431 = vmatpush.msra.mxu0 %v35
    %432 = vmatmul.f32.gmra.mxu0 %v414
    %v433 = vpop.f32.mrf.mxu0
    %v434 = vadd.f32 %v43, %v433
    %435 = vdwg.mxu0
    %v436 = vxor.u32 %v434, 2147483648
    %v437 = vmul.f32 %v436, 1.442695
    %v438 = vpow.pop %v437
    %v439 = vadd.f32 %v438, 1.0
    %v440 = vrcp.pop %v439
    %v441 = vmul.f32 %v439, %v440
    %v442 = vsub.f32 1.0, %v441
    %v443 = vmul.f32 %v440, %v442
    %v444 = vadd.f32 %v440, %v443
    %vm445 = vweird.f32 %v439
    %vm446 = vweird.f32 %v440
    %vm447 = vmor %vm445, %vm446
    %v448 = vsel %vm447, %v440, %v444
    %v449 = vand.u32 2147483647, %v439
    %vm450 = vcmp.eq.f32.partialorder %v449, 8.507059e+37
    %v451 = vand.u32 %v439, 2147483648
    %v452 = vor.u32 1.1754944e-38, %v451
    %v453 = vsel %vm450, %v452, %v448
    %v454 = vmul.f32 1.0, %v453
    %456 = vrot.lane.b32.xlu0 %v434, 32
    %v457 = vpop.permute.xlu0 %456
    %v459 = vmul.f32 %v454, %v457
    %461 = vrot.lane.b32.xlu0 %v459, 64
    %v462 = vpop.permute.xlu0 %461
    %v464 = vadd.f32 %v434, %v462
    %v465 = vtanh.pop %v464
    %v466 = vsub.f32 1.0, %v454
    %468 = vrot.lane.b32.xlu0 %v465, 96
    %v469 = vpop.permute.xlu0 %468
    %v471 = vmul.f32 %v466, %v469
    %v472 = vmul.f32 %v454, %v402
    %v473 = vadd.f32 %v471, %v472
    %475 = vrot.lane.b32.xlu0 %v473, 96
    %v476 = vpop.permute.xlu0 %475
    %478 = vst.msk [vmem:[#allocation2 + $0x5] sm:$0x1] %vm122, %v476
    %s479 = sld [smem:[#allocation4 + $0x6]]
    %s480 = scalar_lea.vmem %s1, %s479
    %v481 = vld [vmem:[%s480] sm:$0x1]
    %v482 = vmax.f32 %v481, 0.0
    %v483 = vsel %vm54, %v482, %v473
    %v485 = vsel %vm56, %v483, 0
    %487 = vmatpush.msra.mxu0 0.0
    %488 = vmatpush.msra.mxu0 0.0
    %489 = vmatpush.msra.mxu0 0.0
    %490 = vmatpush.msra.mxu0 0.0
    %491 = vmatpush.msra.mxu0 0.0
    %492 = vmatpush.msra.mxu0 0.0
    %493 = vmatpush.msra.mxu0 0.0
    %494 = vmatpush.msra.mxu0 0.0
    %495 = vmatpush.msra.mxu0 %v42
    %496 = vmatpush.msra.mxu0 %v41
    %497 = vmatpush.msra.mxu0 %v40
    %498 = vmatpush.msra.mxu0 %v39
    %499 = vmatpush.msra.mxu0 %v38
    %500 = vmatpush.msra.mxu0 %v37
    %501 = vmatpush.msra.mxu0 %v36
    %502 = vmatpush.msra.mxu0 %v35
    %503 = vmatmul.f32.gmra.mxu0 %v485
    %v504 = vpop.f32.mrf.mxu0
    %v505 = vadd.f32 %v43, %v504
    %506 = vdwg.mxu0
    %v507 = vxor.u32 %v505, 2147483648
    %v508 = vmul.f32 %v507, 1.442695
    %v509 = vpow.pop %v508
    %v510 = vadd.f32 %v509, 1.0
    %v511 = vrcp.pop %v510
    %v512 = vmul.f32 %v510, %v511
    %v513 = vsub.f32 1.0, %v512
    %v514 = vmul.f32 %v511, %v513
    %v515 = vadd.f32 %v511, %v514
    %vm516 = vweird.f32 %v510
    %vm517 = vweird.f32 %v511
    %vm518 = vmor %vm516, %vm517
    %v519 = vsel %vm518, %v511, %v515
    %v520 = vand.u32 2147483647, %v510
    %vm521 = vcmp.eq.f32.partialorder %v520, 8.507059e+37
    %v522 = vand.u32 %v510, 2147483648
    %v523 = vor.u32 1.1754944e-38, %v522
    %v524 = vsel %vm521, %v523, %v519
    %v525 = vmul.f32 1.0, %v524
    %527 = vrot.lane.b32.xlu0 %v505, 32
    %v528 = vpop.permute.xlu0 %527
    %v530 = vmul.f32 %v525, %v528
    %532 = vrot.lane.b32.xlu0 %v530, 64
    %v533 = vpop.permute.xlu0 %532
    %v535 = vadd.f32 %v505, %v533
    %v536 = vtanh.pop %v535
    %v537 = vsub.f32 1.0, %v525
    %539 = vrot.lane.b32.xlu0 %v536, 96
    %v540 = vpop.permute.xlu0 %539
    %v542 = vmul.f32 %v537, %v540
    %v543 = vmul.f32 %v525, %v473
    %v544 = vadd.f32 %v542, %v543
    %546 = vrot.lane.b32.xlu0 %v544, 96
    %v547 = vpop.permute.xlu0 %546
    %549 = vst.msk [vmem:[#allocation2 + $0x6] sm:$0x1] %vm122, %v547
    %s550 = sld [smem:[#allocation4 + $0x7]]
    %s551 = scalar_lea.vmem %s1, %s550
    %v552 = vld [vmem:[%s551] sm:$0x1]
    %v553 = vmax.f32 %v552, 0.0
    %v554 = vsel %vm54, %v553, %v544
    %v556 = vsel %vm56, %v554, 0
    %558 = vmatpush.msra.mxu0 0.0
    %559 = vmatpush.msra.mxu0 0.0
    %560 = vmatpush.msra.mxu0 0.0
    %561 = vmatpush.msra.mxu0 0.0
    %562 = vmatpush.msra.mxu0 0.0
    %563 = vmatpush.msra.mxu0 0.0
    %564 = vmatpush.msra.mxu0 0.0
    %565 = vmatpush.msra.mxu0 0.0
    %566 = vmatpush.msra.mxu0 %v42
    %567 = vmatpush.msra.mxu0 %v41
    %568 = vmatpush.msra.mxu0 %v40
    %569 = vmatpush.msra.mxu0 %v39
    %570 = vmatpush.msra.mxu0 %v38
    %571 = vmatpush.msra.mxu0 %v37
    %572 = vmatpush.msra.mxu0 %v36
    %573 = vmatpush.msra.mxu0 %v35
    %574 = vmatmul.f32.gmra.mxu0 %v556
    %v575 = vpop.f32.mrf.mxu0
    %v576 = vadd.f32 %v43, %v575
    %577 = vdwg.mxu0
    %v578 = vxor.u32 %v576, 2147483648
    %v579 = vmul.f32 %v578, 1.442695
    %v580 = vpow.pop %v579
    %v581 = vadd.f32 %v580, 1.0
    %v582 = vrcp.pop %v581
    %v583 = vmul.f32 %v581, %v582
    %v584 = vsub.f32 1.0, %v583
    %v585 = vmul.f32 %v582, %v584
    %v586 = vadd.f32 %v582, %v585
    %vm587 = vweird.f32 %v581
    %vm588 = vweird.f32 %v582
    %vm589 = vmor %vm587, %vm588
    %v590 = vsel %vm589, %v582, %v586
    %v591 = vand.u32 2147483647, %v581
    %vm592 = vcmp.eq.f32.partialorder %v591, 8.507059e+37
    %v593 = vand.u32 %v581, 2147483648
    %v594 = vor.u32 1.1754944e-38, %v593
    %v595 = vsel %vm592, %v594, %v590
    %v596 = vmul.f32 1.0, %v595
    %598 = vrot.lane.b32.xlu0 %v576, 32
    %v599 = vpop.permute.xlu0 %598
    %v601 = vmul.f32 %v596, %v599
    %603 = vrot.lane.b32.xlu0 %v601, 64
    %v604 = vpop.permute.xlu0 %603
    %v606 = vadd.f32 %v576, %v604
    %v607 = vtanh.pop %v606
    %v608 = vsub.f32 1.0, %v596
    %610 = vrot.lane.b32.xlu0 %v607, 96
    %v611 = vpop.permute.xlu0 %610
    %v613 = vmul.f32 %v608, %v611
    %v614 = vmul.f32 %v596, %v544
    %v615 = vadd.f32 %v613, %v614
    %617 = vrot.lane.b32.xlu0 %v615, 96
    %v618 = vpop.permute.xlu0 %617
    %620 = vst.msk [vmem:[#allocation2 + $0x7] sm:$0x1] %vm122, %v618
    %621 = vst.msk [vmem:[#allocation5] sm:$0x1] %vm122, %v618
    %v622 = vld [vmem:[#allocation2] sm:$0xff]
    %v623 = vld [vmem:[%s5] sm:$0xff]
    %v624 = vld [vmem:[%s5 + $0x8] sm:$0xff]
    %v625 = vld [vmem:[%s5 + $0x10] sm:$0xff]
    %v626 = vld [vmem:[%s5 + $0x18] sm:$0xff]
    %v627 = vld [vmem:[%s6] sm:$0x1]
    %v629 = vperm.slane %v627, 0
    %v632 = vsel %vm54, %v622, 0
    %634 = vmatpush.msra.mxu0 0.0
    %635 = vmatpush.msra.mxu0 0.0
    %636 = vmatpush.msra.mxu0 0.0
    %637 = vmatpush.msra.mxu0 0.0
    %638 = vmatpush.msra.mxu0 0.0
    %639 = vmatpush.msra.mxu0 0.0
    %640 = vmatpush.msra.mxu0 0.0
    %641 = vmatpush.msra.mxu0 0.0
    %642 = vmatpush.msra.mxu0 0.0
    %643 = vmatpush.msra.mxu0 0.0
    %644 = vmatpush.msra.mxu0 0.0
    %645 = vmatpush.msra.mxu0 0.0
    %646 = vmatpush.msra.mxu0 %v626
    %647 = vmatpush.msra.mxu0 %v625
    %648 = vmatpush.msra.mxu0 %v624
    %649 = vmatpush.msra.mxu0 %v623
    %650 = vmatmul.f32.gmra.mxu0 %v632
    %v651 = vpop.f32.mrf.mxu0
    %v652 = vadd.f32 %v629, %v651
    %653 = vdwg.mxu0
    %654 = vst [vmem:[%s7] sm:$0xff] %v652
    // Predicated region
    $region26: #{decoder_decode.1} parent=1 // pred_check
      _
    $region27: #{decoder_decode.1} parent=1 // pred_check_branch
      %656 = sbr.rel (0) target = $region29
    $region28: #{decoder_decode.1} parent=1 // pred_region
      _
    $region29: #{decoder_decode.1} parent=1 // pred_fallthru
      _
    // Predicated region
    $region30: #{decoder_decode.1} parent=1 // pred_check
      _
    $region31: #{decoder_decode.1} parent=1 // pred_check_branch
      %658 = sbr.rel (0) target = $region33
    $region32: #{decoder_decode.1} parent=1 // pred_region
      %660 = vsyncadd [#allocation6], 0
      %s662 = sshll.u32 [#allocation5], 4
      %s663 = int_to_ptr.vmem [resolvable:$true] %s662
      %s664 = sshll.u32 %s8, 4
      %s665 = int_to_ptr.hbm [resolvable:$true] %s664
      %667 = dma.vmem_to_hbm [thread:$0]  %s663, 16, %s665, [#allocation6]
    $region33: #{decoder_decode.1} parent=1 // pred_fallthru
      _
    // Predicated region
    $region34: #{decoder_decode.1} parent=1 // pred_check
      _
    $region35: #{decoder_decode.1} parent=1 // pred_check_branch
      %669 = sbr.rel (0) target = $region37
    $region36: #{decoder_decode.1} parent=1 // pred_region
      _
    $region37: #{decoder_decode.1} parent=1 // pred_fallthru
      _
    // Predicated region
    $region38: #{decoder_decode.1} parent=1 // pred_check
      _
    $region39: #{decoder_decode.1} parent=1 // pred_check_branch
      %671 = sbr.rel (0) target = $region41
    $region40: #{decoder_decode.1} parent=1 // pred_region
      %673 = dma.done [#allocation6], 16
    $region41: #{decoder_decode.1} parent=1 // pred_fallthru
      _
    %674 = vsyncpa [#allocation6], 1

</llo_original>
